<compile_context>
chip_gen: v7x
topology: tpu7x:2x2x1
jax: 0.10.0
libtpu: 0.0.40
codegen_flags: <defaults>
</compile_context>

<pallas_src>
import functools

import jax
import jax.numpy as jnp
import numpy as np
from jax.experimental import pallas as pl
from jax.experimental.pallas import tpu as pltpu


# ------------------------------- helpers ----------------------------------- #

def _round_up(v, m):
    return (v + m - 1) // m * m


def _divisors(n):
    return [d for d in range(1, n + 1) if n % d == 0]


def _pick_row_tile(oh, ow, k_dim, cpad, budget=4 << 20):
    """Output-row tile `th` for the conv kernel.

    Constraints: th divides OH; the lane dim of the y block (th*OW) is a multiple
    of 128 (or th == OH so the block spans the full flattened-spatial dim); the
    per-tile VMEM estimate stays under `budget`.  Prefers >= 2 spatial tiles so
    megacore (v7x) has something to shard.
    """
    def tile_bytes(th):
        rows = th * ow
        # f32 acc + f32 transpose temp + bf16 patch + double-buffered bf16 y block
        return rows * cpad * 4 * 2 + rows * k_dim * 2 + 2 * rows * cpad * 2

    divs = _divisors(oh)
    fit = [d for d in divs if tile_bytes(d) <= budget] or divs
    lane_ok = [d for d in fit if (d * ow) % 128 == 0]
    if not lane_ok:
        return oh                       # single tile: block spans the full row dim
    multi = [d for d in lane_ok if oh // d >= 2]
    return max(multi) if multi else max(lane_ok)


def _pick_lane_tile(ohw, cout, budget=4 << 20):
    """Lane tile for the BN+ReLU kernel: divides OH*OW, multiple of 128 (or the
    full dim), double-buffered bf16-in + f32-out under `budget`."""
    per_col = 2 * max(1, cout) * (2 + 4)
    cap = max(1, budget // per_col)
    cands = [d for d in _divisors(ohw) if d % 128 == 0 and d <= cap]
    return max(cands) if cands else ohw


# ----------------------------- Pallas kernels ------------------------------ #

def _conv_stats_kernel(x_ref, w_ref, y_ref, sum_ref, sq_ref, *,
                       n_kh, n_kw, oh_t, ow, stride, cout):
    """Fused-tap conv (single MXU matmul) for one (image, row-tile) grid step,
    plus per-tile partial batch statistics.

    x_ref   : (1, Hp, Wp, Cin)       bf16  whole padded image (stays resident per n)
    w_ref   : (KH*KW*Cin, Cpad)      bf16  flattened conv weight (lane-dense Cout)
    y_ref   : (1, Cout, oh_t*OW)     bf16  conv output, channel-major (NCHW-flat)
    sum_ref : (1, 1, Cpad)           f32   partial per-channel sum over this tile
    sq_ref  : (1, 1, Cpad)           f32   partial per-channel sum of squares
    """
    t = pl.program_id(1)
    row_step = oh_t * stride
    in_rows = (oh_t - 1) * stride + n_kh
    row0 = pl.multiple_of(t * row_step, row_step)

    # Rows of the padded image needed for this output-row tile.
    xp = x_ref[0, pl.ds(row0, in_rows), :, :]            # (in_rows, Wp, Cin) bf16
    # TODO(synk): pack Cin into the lane dim (space-to-depth) so stride>1 inputs get
    # lane-dense DMAs; with tiny Cin the NHWC tiles are mostly layout padding.

    # Build the concatenated im2col patch on-chip (shift windows, concat taps).
    wins = []
    for i in range(n_kh):                                # static unroll over taps
        for j in range(n_kw):
            wins.append(xp[i:i + (oh_t - 1) * stride + 1:stride,
                           j:j + (ow - 1) * stride + 1:stride, :])
    patch = jnp.concatenate(wins, axis=-1)               # (oh_t, OW, KH*KW*Cin)
    patch = patch.reshape(oh_t * ow, patch.shape[-1])    # (rows, K) bf16

    # Single large-K MXU matmul, f32 accumulation.
    acc = jnp.dot(patch, w_ref[...], preferred_element_type=jnp.float32)

    # Partial batch statistics (f32) for this (image, row-tile).
    sum_ref[0] = jnp.sum(acc, axis=0, keepdims=True)
    sq_ref[0] = jnp.sum(acc * acc, axis=0, keepdims=True)

    # Transpose on-chip (XLU), drop the Cpad padding, store bf16 channel-major.
    y_ref[0] = acc.T[:cout, :].astype(y_ref.dtype)


def _bn_relu_kernel(y_ref, scale_ref, shift_ref, o_ref):
    """Per-channel affine (folded BatchNorm) + ReLU on a (Cout, rows) tile.

    f32 VPU math (v5e-safe); bf16 only as the storage dtype of y.
    """
    y = y_ref[0].astype(jnp.float32)                     # (Cout, tm)
    o_ref[0] = jnp.maximum(y * scale_ref[...] + shift_ref[...], 0.0)


# ------------------------------- wrapper ----------------------------------- #

@functools.partial(jax.jit, static_argnames=("stride", "padding"))
def conv_block_forward(x_nchw, weight, bias, gamma, beta,
                       *, stride=1, padding=1, eps=1e-5):
    """Forward of ConvBlock: Conv2d -> BatchNorm2d (batch stats) -> ReLU.

    x_nchw : (N, Cin, H, W)    float32  (PyTorch NCHW convention)
    weight : (Cout, Cin, KH, KW)        (PyTorch OIHW convention)
    bias   : (Cout,)  accepted but unused: training-mode BN cancels it exactly
    gamma, beta : (Cout,)  BatchNorm affine parameters
    returns: (N, Cout, OH, OW) float32
    """
    del bias  # exactly cancelled by BatchNorm's batch-mean subtraction
    # TODO(synk): keep the bias if this is ever reused with eval-mode running stats.

    N, Cin, H, W = x_nchw.shape
    Cout, _, KH, KW = weight.shape
    OH = (H + 2 * padding - KH) // stride + 1
    OW = (W + 2 * padding - KW) // stride + 1
    OHW = OH * OW
    M = N * OHW
    K = KH * KW * Cin
    Cpad = _round_up(Cout, 128)                 # lane-dense MXU output columns only
    Hp, Wp = H + 2 * padding, W + 2 * padding

    # ---- glue: NHWC + spatial zero-pad (single 1x copy), bf16 MXU operand ----
    x = jnp.transpose(x_nchw, (0, 2, 3, 1))
    x_pad = jnp.pad(x, ((0, 0), (padding, padding), (padding, padding), (0, 0)))
    x_pad = x_pad.astype(jnp.bfloat16)

    # (KH, KW, Cin, Cout) -> (K, Cpad) bf16, tap order matching the in-kernel concat.
    w = jnp.transpose(weight, (2, 3, 1, 0)).reshape(K, Cout)
    w = jnp.pad(w, ((0, 0), (0, Cpad - Cout))).astype(jnp.bfloat16)

    th = _pick_row_tile(OH, OW, K, Cpad)
    T = OH // th
    rows = th * OW

    # ---- kernel 1: fused-tap conv + partial batch stats, grid=(N, row tiles) ----
    kernel1 = functools.partial(_conv_stats_kernel, n_kh=KH, n_kw=KW,
                                oh_t=th, ow=OW, stride=stride, cout=Cout)
    y, psum, psq = pl.pallas_call(
        kernel1,
        out_shape=(jax.ShapeDtypeStruct((N, Cout, OHW), jnp.bfloat16),
                   jax.ShapeDtypeStruct((N * T, 1, Cpad), jnp.float32),
                   jax.ShapeDtypeStruct((N * T, 1, Cpad), jnp.float32)),
        grid_spec=pltpu.PrefetchScalarGridSpec(
            num_scalar_prefetch=0,
            grid=(N, T),
            in_specs=[pl.BlockSpec((1, Hp, Wp, Cin), lambda n, t: (n, 0, 0, 0)),
                      pl.BlockSpec((K, Cpad), lambda n, t: (0, 0))],
            out_specs=(pl.BlockSpec((1, Cout, rows), lambda n, t: (n, 0, t)),
                       pl.BlockSpec((1, 1, Cpad), lambda n, t: (n * T + t, 0, 0)),
                       pl.BlockSpec((1, 1, Cpad), lambda n, t: (n * T + t, 0, 0)))),
        compiler_params=pltpu.CompilerParams(
            dimension_semantics=("parallel", "parallel"),
            vmem_limit_bytes=32 * 1024 * 1024),
    )(x_pad, w)

    # ---- glue: fold batch statistics into per-channel scale / shift (f32) ----
    s = jnp.sum(psum[:, 0, :Cout], axis=0)               # (Cout,)
    sq = jnp.sum(psq[:, 0, :Cout], axis=0)
    mean = s / M
    # E[y^2]-E[y]^2 in f32: partials are per-tile (pairwise-ish), clamp guards tiny
    # negative rounding.  TODO(synk): switch to shifted/Welford accumulation for huge M.
    var = jnp.maximum(sq / M - mean * mean, 0.0)
    inv_std = gamma.astype(jnp.float32) / jnp.sqrt(var + eps)
    scale = inv_std.reshape(Cout, 1)
    shift = (beta.astype(jnp.float32) - mean * inv_std).reshape(Cout, 1)

    # ---- kernel 2: BN affine + ReLU on lane-dense (Cout, rows) tiles ----
    tm2 = _pick_lane_tile(OHW, Cout)
    T2 = OHW // tm2
    out = pl.pallas_call(
        _bn_relu_kernel,
        out_shape=jax.ShapeDtypeStruct((N, Cout, OHW), jnp.float32),
        grid_spec=pltpu.PrefetchScalarGridSpec(
            num_scalar_prefetch=0,
            grid=(N, T2),
            in_specs=[pl.BlockSpec((1, Cout, tm2), lambda n, t: (n, 0, t)),
                      pl.BlockSpec((Cout, 1), lambda n, t: (0, 0)),
                      pl.BlockSpec((Cout, 1), lambda n, t: (0, 0))],
            out_specs=pl.BlockSpec((1, Cout, tm2), lambda n, t: (n, 0, t))),
        compiler_params=pltpu.CompilerParams(
            dimension_semantics=("parallel", "parallel"),
            vmem_limit_bytes=32 * 1024 * 1024),
    )(y, scale, shift)

    # Free reshape: output is already channel-major (NCHW-flat).
    return out.reshape(N, Cout, OH, OW)


# ------------------------------ reference ---------------------------------- #

def _reference_conv_block(x, w, b, gamma, beta, stride, padding, eps=1e-5):
    y = jax.lax.conv_general_dilated(
        x, w, window_strides=(stride, stride),
        padding=[(padding, padding), (padding, padding)],
        dimension_numbers=("NCHW", "OIHW", "NCHW"))
    y = y + b.reshape(1, -1, 1, 1)
    mean = jnp.mean(y, axis=(0, 2, 3), keepdims=True)
    var = jnp.mean((y - mean) ** 2, axis=(0, 2, 3), keepdims=True)
    yhat = (y - mean) / jnp.sqrt(var + eps)
    return jnp.maximum(yhat * gamma.reshape(1, -1, 1, 1)
                       + beta.reshape(1, -1, 1, 1), 0.0)


# --------------------------------- main ------------------------------------ #

if __name__ == "__main__":
    key = jax.random.PRNGKey(0)
    k_x, k_w, k_b, k_g, k_be = jax.random.split(key, 5)

    N, Cin, H, W = 2, 4, 16, 16
    Cout, KH, KW = 8, 3, 3
    stride, padding = 1, 1

    x = jax.random.normal(k_x, (N, Cin, H, W), dtype=jnp.float32)
    weight = 0.1 * jax.random.normal(k_w, (Cout, Cin, KH, KW), dtype=jnp.float32)
    bias = 0.1 * jax.random.normal(k_b, (Cout,), dtype=jnp.float32)
    gamma = 1.0 + 0.1 * jax.random.normal(k_g, (Cout,), dtype=jnp.float32)
    beta = 0.1 * jax.random.normal(k_be, (Cout,), dtype=jnp.float32)

    out = conv_block_forward(x, weight, bias, gamma, beta,
                             stride=stride, padding=padding)
    out = jax.block_until_ready(out)

    ref = _reference_conv_block(x, weight, bias, gamma, beta, stride, padding)
    # bf16 MXU operands + bf16 intermediate y (f32 accumulation / BN math)
    # -> slightly looser tolerance than pure f32.
    np.testing.assert_allclose(np.asarray(out), np.asarray(ref),
                               rtol=2e-2, atol=4e-2)

    print("KERNEL_OK")
</pallas_src>

<mosaic_0001>
module attributes {stable_mosaic.version = 11 : i64} {
  func.func @_conv_stats_kernel(%arg0: i32, %arg1: i32, %arg2: memref<1x18x18x4xbf16, #tpu.memory_space<vmem>>, %arg3: memref<36x128xbf16, #tpu.memory_space<vmem>>, %arg4: memref<1x8x128xbf16, #tpu.memory_space<vmem>>, %arg5: memref<1x1x128xf32, #tpu.memory_space<vmem>>, %arg6: memref<1x1x128xf32, #tpu.memory_space<vmem>>) attributes {dimension_semantics = [#tpu.dimension_semantics<parallel>, #tpu.dimension_semantics<parallel>], iteration_bounds = array<i64: 2, 2>, scalar_prefetch = 0 : i64, scratch_operands = 0 : i64, tpu.core_type = #tpu.core_type<tc>, window_params = [{transform_indices = @transform_0, window_bounds = array<i64: 1, 18, 18, 4>}, {pipeline_mode = #tpu.pipeline_mode<synchronous>, transform_indices = @transform_1, window_bounds = array<i64: 36, 128>}, {transform_indices = @transform_2, window_bounds = array<i64: 1, 8, 128>}, {transform_indices = @transform_3, window_bounds = array<i64: 1, 1, 128>}, {transform_indices = @transform_4, window_bounds = array<i64: 1, 1, 128>}]} {
    %c8_i32 = arith.constant 8 : i32
    %0 = arith.muli %arg1, %c8_i32 : i32
    %1 = tpu.assume_multiple %0, 8 : i32
    %c0 = arith.constant 0 : index
    %2 = arith.index_cast %1 : i32 to index
    %c0_0 = arith.constant 0 : index
    %c0_1 = arith.constant 0 : index
    %3 = vector.load %arg2[%c0, %2, %c0_0, %c0_1] : memref<1x18x18x4xbf16, #tpu.memory_space<vmem>>, vector<1x10x18x4xbf16>
    %4 = vector.shape_cast %3 : vector<1x10x18x4xbf16> to vector<10x18x4xbf16>
    %5 = vector.extract_strided_slice %4 {offsets = [0, 0, 0], sizes = [8, 16, 4], strides = [1, 1, 1]} : vector<10x18x4xbf16> to vector<8x16x4xbf16>
    %6 = vector.extract_strided_slice %4 {offsets = [0, 1, 0], sizes = [8, 16, 4], strides = [1, 1, 1]} : vector<10x18x4xbf16> to vector<8x16x4xbf16>
    %7 = vector.extract_strided_slice %4 {offsets = [0, 2, 0], sizes = [8, 16, 4], strides = [1, 1, 1]} : vector<10x18x4xbf16> to vector<8x16x4xbf16>
    %8 = vector.extract_strided_slice %4 {offsets = [1, 0, 0], sizes = [8, 16, 4], strides = [1, 1, 1]} : vector<10x18x4xbf16> to vector<8x16x4xbf16>
    %9 = vector.extract_strided_slice %4 {offsets = [1, 1, 0], sizes = [8, 16, 4], strides = [1, 1, 1]} : vector<10x18x4xbf16> to vector<8x16x4xbf16>
    %10 = vector.extract_strided_slice %4 {offsets = [1, 2, 0], sizes = [8, 16, 4], strides = [1, 1, 1]} : vector<10x18x4xbf16> to vector<8x16x4xbf16>
    %11 = vector.extract_strided_slice %4 {offsets = [2, 0, 0], sizes = [8, 16, 4], strides = [1, 1, 1]} : vector<10x18x4xbf16> to vector<8x16x4xbf16>
    %12 = vector.extract_strided_slice %4 {offsets = [2, 1, 0], sizes = [8, 16, 4], strides = [1, 1, 1]} : vector<10x18x4xbf16> to vector<8x16x4xbf16>
    %13 = vector.extract_strided_slice %4 {offsets = [2, 2, 0], sizes = [8, 16, 4], strides = [1, 1, 1]} : vector<10x18x4xbf16> to vector<8x16x4xbf16>
    %14 = tpu.concatenate %5, %6, %7, %8, %9, %10, %11, %12, %13 in 2 : vector<8x16x4xbf16>, vector<8x16x4xbf16>, vector<8x16x4xbf16>, vector<8x16x4xbf16>, vector<8x16x4xbf16>, vector<8x16x4xbf16>, vector<8x16x4xbf16>, vector<8x16x4xbf16>, vector<8x16x4xbf16> -> vector<8x16x36xbf16>
    %15 = vector.shape_cast %14 : vector<8x16x36xbf16> to vector<128x36xbf16>
    %c0_2 = arith.constant 0 : index
    %c0_3 = arith.constant 0 : index
    %16 = vector.load %arg3[%c0_2, %c0_3] : memref<36x128xbf16, #tpu.memory_space<vmem>>, vector<36x128xbf16>
    %cst = arith.constant dense<0.000000e+00> : vector<128x128xf32>
    %17 = tpu.matmul %15, %16, %cst {dimension_numbers = #tpu.dot_dimension_numbers<[1], [0], [0], [1], [0, 0, 1, 1], [], []>} : vector<128x36xbf16>, vector<36x128xbf16>, vector<128x128xf32> -> vector<128x128xf32>
    %cst_4 = arith.constant dense<0.000000e+00> : vector<128xf32>
    %18 = vector.multi_reduction <add>, %17, %cst_4 [0] : vector<128x128xf32> to vector<128xf32>
    %19 = vector.shape_cast %18 : vector<128xf32> to vector<1x128xf32>
    %c0_5 = arith.constant 0 : index
    %c0_6 = arith.constant 0 : index
    %c0_7 = arith.constant 0 : index
    %20 = vector.load %arg5[%c0_5, %c0_6, %c0_7] : memref<1x1x128xf32, #tpu.memory_space<vmem>>, vector<1x1x128xf32>
    %21 = vector.shape_cast %20 : vector<1x1x128xf32> to vector<1x128xf32>
    %22 = vector.shape_cast %19 : vector<1x128xf32> to vector<1x1x128xf32>
    tpu.vector_store %arg5[%c0_5, %c0_6, %c0_7], %22 {strides = array<i32>} : memref<1x1x128xf32, #tpu.memory_space<vmem>>, vector<1x1x128xf32>,
    %23 = arith.mulf %17, %17 : vector<128x128xf32>
    %cst_8 = arith.constant dense<0.000000e+00> : vector<128xf32>
    %24 = vector.multi_reduction <add>, %23, %cst_8 [0] : vector<128x128xf32> to vector<128xf32>
    %25 = vector.shape_cast %24 : vector<128xf32> to vector<1x128xf32>
    %c0_9 = arith.constant 0 : index
    %c0_10 = arith.constant 0 : index
    %c0_11 = arith.constant 0 : index
    %26 = vector.load %arg6[%c0_9, %c0_10, %c0_11] : memref<1x1x128xf32, #tpu.memory_space<vmem>>, vector<1x1x128xf32>
    %27 = vector.shape_cast %26 : vector<1x1x128xf32> to vector<1x128xf32>
    %28 = vector.shape_cast %25 : vector<1x128xf32> to vector<1x1x128xf32>
    tpu.vector_store %arg6[%c0_9, %c0_10, %c0_11], %28 {strides = array<i32>} : memref<1x1x128xf32, #tpu.memory_space<vmem>>, vector<1x1x128xf32>,
    %29 = tpu.transpose %17, [1, 0] : vector<128x128xf32> -> vector<128x128xf32>
    %30 = vector.extract_strided_slice %29 {offsets = [0, 0], sizes = [8, 128], strides = [1, 1]} : vector<128x128xf32> to vector<8x128xf32>
    %31 = arith.truncf %30 : vector<8x128xf32> to vector<8x128xbf16>
    %c0_12 = arith.constant 0 : index
    %c0_13 = arith.constant 0 : index
    %c0_14 = arith.constant 0 : index
    %32 = vector.load %arg4[%c0_12, %c0_13, %c0_14] : memref<1x8x128xbf16, #tpu.memory_space<vmem>>, vector<1x8x128xbf16>
    %33 = vector.shape_cast %32 : vector<1x8x128xbf16> to vector<8x128xbf16>
    %34 = vector.shape_cast %31 : vector<8x128xbf16> to vector<1x8x128xbf16>
    tpu.vector_store %arg4[%c0_12, %c0_13, %c0_14], %34 {strides = array<i32>} : memref<1x8x128xbf16, #tpu.memory_space<vmem>>, vector<1x8x128xbf16>,
    return
  }
  func.func @transform_0(%arg0: i32, %arg1: i32) -> (i32, i32, i32, i32) {
    %c0_i32 = arith.constant 0 : i32
    %c0_i32_0 = arith.constant 0 : i32
    %c0_i32_1 = arith.constant 0 : i32
    %c0_i32_2 = arith.constant 0 : i32
    return %arg0, %c0_i32, %c0_i32_0, %c0_i32_1 : i32, i32, i32, i32
  }
  func.func @transform_1(%arg0: i32, %arg1: i32) -> (i32, i32) {
    %c0_i32 = arith.constant 0 : i32
    %c0_i32_0 = arith.constant 0 : i32
    %c0_i32_1 = arith.constant 0 : i32
    return %c0_i32, %c0_i32_0 : i32, i32
  }
  func.func @transform_2(%arg0: i32, %arg1: i32) -> (i32, i32, i32) {
    %c0_i32 = arith.constant 0 : i32
    %c0_i32_0 = arith.constant 0 : i32
    return %arg0, %c0_i32, %arg1 : i32, i32, i32
  }
  func.func @transform_3(%arg0: i32, %arg1: i32) -> (i32, i32, i32) {
    %c2_i32 = arith.constant 2 : i32
    %0 = arith.muli %arg0, %c2_i32 : i32
    %1 = arith.addi %0, %arg1 : i32
    %c0_i32 = arith.constant 0 : i32
    %c0_i32_0 = arith.constant 0 : i32
    %c0_i32_1 = arith.constant 0 : i32
    return %1, %c0_i32, %c0_i32_0 : i32, i32, i32
  }
  func.func @transform_4(%arg0: i32, %arg1: i32) -> (i32, i32, i32) {
    %c2_i32 = arith.constant 2 : i32
    %0 = arith.muli %arg0, %c2_i32 : i32
    %1 = arith.addi %0, %arg1 : i32
    %c0_i32 = arith.constant 0 : i32
    %c0_i32_0 = arith.constant 0 : i32
    %c0_i32_1 = arith.constant 0 : i32
    return %1, %c0_i32, %c0_i32_0 : i32, i32, i32
  }
}

module attributes {stable_mosaic.version = 11 : i64} {
  func.func @_bn_relu_kernel(%arg0: i32, %arg1: i32, %arg2: memref<1x8x256xbf16, #tpu.memory_space<vmem>>, %arg3: memref<8x1xf32, #tpu.memory_space<vmem>>, %arg4: memref<8x1xf32, #tpu.memory_space<vmem>>, %arg5: memref<1x8x256xf32, #tpu.memory_space<vmem>>) attributes {dimension_semantics = [#tpu.dimension_semantics<parallel>, #tpu.dimension_semantics<parallel>], iteration_bounds = array<i64: 2, 1>, scalar_prefetch = 0 : i64, scratch_operands = 0 : i64, tpu.core_type = #tpu.core_type<tc>, window_params = [{transform_indices = @transform_0, window_bounds = array<i64: 1, 8, 256>}, {pipeline_mode = #tpu.pipeline_mode<synchronous>, transform_indices = @transform_1, window_bounds = array<i64: 8, 1>}, {pipeline_mode = #tpu.pipeline_mode<synchronous>, transform_indices = @transform_2, window_bounds = array<i64: 8, 1>}, {transform_indices = @transform_3, window_bounds = array<i64: 1, 8, 256>}]} {
    %c0 = arith.constant 0 : index
    %c0_0 = arith.constant 0 : index
    %c0_1 = arith.constant 0 : index
    %0 = vector.load %arg2[%c0, %c0_0, %c0_1] : memref<1x8x256xbf16, #tpu.memory_space<vmem>>, vector<1x8x256xbf16>
    %1 = vector.shape_cast %0 : vector<1x8x256xbf16> to vector<8x256xbf16>
    %2 = arith.extf %1 : vector<8x256xbf16> to vector<8x256xf32>
    %c0_2 = arith.constant 0 : index
    %c0_3 = arith.constant 0 : index
    %3 = vector.load %arg3[%c0_2, %c0_3] : memref<8x1xf32, #tpu.memory_space<vmem>>, vector<8x1xf32>
    %4 = vector.broadcast %3 : vector<8x1xf32> to vector<8x256xf32>
    %5 = arith.mulf %2, %4 : vector<8x256xf32>
    %c0_4 = arith.constant 0 : index
    %c0_5 = arith.constant 0 : index
    %6 = vector.load %arg4[%c0_4, %c0_5] : memref<8x1xf32, #tpu.memory_space<vmem>>, vector<8x1xf32>
    %7 = vector.broadcast %6 : vector<8x1xf32> to vector<8x256xf32>
    %8 = arith.addf %5, %7 : vector<8x256xf32>
    %cst = arith.constant 0.000000e+00 : f32
    %9 = vector.broadcast %cst : f32 to vector<8x256xf32>
    %10 = arith.maximumf %8, %9 : vector<8x256xf32>
    %c0_6 = arith.constant 0 : index
    %c0_7 = arith.constant 0 : index
    %c0_8 = arith.constant 0 : index
    %11 = vector.load %arg5[%c0_6, %c0_7, %c0_8] : memref<1x8x256xf32, #tpu.memory_space<vmem>>, vector<1x8x256xf32>
    %12 = vector.shape_cast %11 : vector<1x8x256xf32> to vector<8x256xf32>
    %13 = vector.shape_cast %10 : vector<8x256xf32> to vector<1x8x256xf32>
    tpu.vector_store %arg5[%c0_6, %c0_7, %c0_8], %13 {strides = array<i32>} : memref<1x8x256xf32, #tpu.memory_space<vmem>>, vector<1x8x256xf32>,
    return
  }
  func.func @transform_0(%arg0: i32, %arg1: i32) -> (i32, i32, i32) {
    %c0_i32 = arith.constant 0 : i32
    %c0_i32_0 = arith.constant 0 : i32
    return %arg0, %c0_i32, %arg1 : i32, i32, i32
  }
  func.func @transform_1(%arg0: i32, %arg1: i32) -> (i32, i32) {
    %c0_i32 = arith.constant 0 : i32
    %c0_i32_0 = arith.constant 0 : i32
    %c0_i32_1 = arith.constant 0 : i32
    return %c0_i32, %c0_i32_0 : i32, i32
  }
  func.func @transform_2(%arg0: i32, %arg1: i32) -> (i32, i32) {
    %c0_i32 = arith.constant 0 : i32
    %c0_i32_0 = arith.constant 0 : i32
    %c0_i32_1 = arith.constant 0 : i32
    return %c0_i32, %c0_i32_0 : i32, i32
  }
  func.func @transform_3(%arg0: i32, %arg1: i32) -> (i32, i32, i32) {
    %c0_i32 = arith.constant 0 : i32
    %c0_i32_0 = arith.constant 0 : i32
    return %arg0, %c0_i32, %arg1 : i32, i32, i32
  }
}

</mosaic_0001>

<llo_original>
// kernel: conv_block_forward.3
$region0: #{conv_block_forward.3}
  #allocation0 [shape = 'u32[]', space=smem, size = 0x4, offset = 0x4, fixed_abs, tag = 'smem constant byte address 0x4 - core index']
  #allocation1 [shape = 'u32[144,128]{1,0:T(1,128)}', space=vmem, size = 0x12000, scoped, tag = 'internal scratch']
  %s0 = inlined_call_operand.vmem [shape: bf16[2,8,256], index: 0, kind: input, shape index: {}]
  %s1 = inlined_call_operand.vmem [shape: f32[8,1], index: 1, kind: input, shape index: {}]
  %s2 = inlined_call_operand.vmem [shape: f32[8,1], index: 2, kind: input, shape index: {}]
  %s3 = inlined_call_operand.vmem [shape: f32[2,8,256], index: 3, kind: output, shape index: {}]
  %s4 = sld [smem:[#allocation0]]
  $region45: #{conv_block_forward.3} parent=0
    _
  %s6 = ssub.s32 1, %s4
  %s7 = scalar_select 0, %s6, %s4
  loop: start=0, step=1, limit=4
  $region2: #{conv_block_forward.3} parent=0 // loop_pre_header
    _
  $region3: #{conv_block_forward.3} parent=0 // loop_header
    %s9 = sphi 0, %s13
    %p10 = scmp.ge.s32.totalorder %s9, 4
    %s16 = sphi 0, %s28
    %s17 = sphi 0, %s24
    %s18 = sphi 0, %s16
    %s19 = sphi 0, %s17
    %s20 = sphi 0, %s18
    %s21 = sphi 0, %s19
    %s33 = sphi 0, %s35
    %s36 = sphi 0, %s33
    %s37 = sphi 0, %s36
    %s53 = sphi 0, %s37
    %s57 = sphi 0, %s57
    %s59 = sphi 0, %s57
    %s60 = sphi 0, %s59
    %s74 = sphi 0, %s60
    %s78 = sphi 0, %s78
    %s80 = sphi 0, %s78
    %s81 = sphi 0, %s80
    %s95 = sphi 0, %s81
    %s103 = sphi 0, %s105
    %s106 = sphi 0, %s103
    %s107 = sphi 0, %s106
    %s123 = sphi 0, %s107
  $region4: #{conv_block_forward.3} parent=0 // loop_header_branch
    %12 = sbr.rel (%p10) target = $region8
  $region5: #{conv_block_forward.3} parent=0 // loop_body
    %s14 = ssub.s32 %s9, 1
    %s15 = ssub.s32 %s9, 2
    %s22 = sadd.s32 1, %s17
    %p23 = scmp.ge.s32.totalorder %s22, 1
    %s24 = scalar_select %p23, 0, %s22
    %s25 = sadd.s32 1, %s16
    %s26 = scalar_select %p23, %s25, %s16
    %p27 = scmp.ge.s32.totalorder %s26, 2
    %s28 = scalar_select %p27, 0, %s26
    %s29 = ssub.s32 %s16, %s28
    %s30 = ssub.s32 %s17, %s24
    %s31 = sor.u32 %s29, %s30
    %p32 = scmp.eq.s32.totalorder %s31, 0
    %s34 = sadd.s32 %s33, 1
    %s35 = scalar_select %p32, %s33, %s34
    %p38 = pneg %p32
    %p39 = scmp.eq.s32.totalorder %s9, 1
    %p40 = por %p38, %p39
    %p41 = scmp.ne.s32.totalorder %s33, %s36
    %p42 = scmp.eq.s32.totalorder %s9, 0
    %p43 = por %p41, %p42
    %p44 = scmp.ne.s32.totalorder %s33, %s36
    %p45 = scmp.eq.s32.totalorder %s14, 1
    %p46 = por %p44, %p45
    %p47 = scmp.ne.s32.totalorder %s36, %s37
    %p48 = scmp.eq.s32.totalorder %s14, 0
    %p49 = por %p47, %p48
    %p50 = scmp.ne.s32.totalorder %s36, %s37
    %p51 = scmp.eq.s32.totalorder %s15, 1
    %p52 = por %p50, %p51
    %p54 = scmp.ne.s32.totalorder %s37, %s53
    %p55 = scmp.eq.s32.totalorder %s15, 0
    %p56 = por %p54, %p55
    %s58 = sadd.s32 %s57, 1
    %p61 = scmp.eq.s32.totalorder %s9, 1
    %p62 = scmp.ne.s32.totalorder %s57, %s59
    %p63 = scmp.eq.s32.totalorder %s9, 0
    %p64 = por %p62, %p63
    %p65 = scmp.ne.s32.totalorder %s57, %s59
    %p66 = scmp.eq.s32.totalorder %s14, 1
    %p67 = por %p65, %p66
    %p68 = scmp.ne.s32.totalorder %s59, %s60
    %p69 = scmp.eq.s32.totalorder %s14, 0
    %p70 = por %p68, %p69
    %p71 = scmp.ne.s32.totalorder %s59, %s60
    %p72 = scmp.eq.s32.totalorder %s15, 1
    %p73 = por %p71, %p72
    %p75 = scmp.ne.s32.totalorder %s60, %s74
    %p76 = scmp.eq.s32.totalorder %s15, 0
    %p77 = por %p75, %p76
    %s79 = sadd.s32 %s78, 1
    %p82 = scmp.eq.s32.totalorder %s9, 1
    %p83 = scmp.ne.s32.totalorder %s78, %s80
    %p84 = scmp.eq.s32.totalorder %s9, 0
    %p85 = por %p83, %p84
    %p86 = scmp.ne.s32.totalorder %s78, %s80
    %p87 = scmp.eq.s32.totalorder %s14, 1
    %p88 = por %p86, %p87
    %p89 = scmp.ne.s32.totalorder %s80, %s81
    %p90 = scmp.eq.s32.totalorder %s14, 0
    %p91 = por %p89, %p90
    %p92 = scmp.ne.s32.totalorder %s80, %s81
    %p93 = scmp.eq.s32.totalorder %s15, 1
    %p94 = por %p92, %p93
    %p96 = scmp.ne.s32.totalorder %s81, %s95
    %p97 = scmp.eq.s32.totalorder %s15, 0
    %p98 = por %p96, %p97
    %s99 = ssub.s32 %s16, %s28
    %s100 = ssub.s32 %s17, %s24
    %s101 = sor.u32 %s99, %s100
    %p102 = scmp.eq.s32.totalorder %s101, 0
    %s104 = sadd.s32 %s103, 1
    %s105 = scalar_select %p102, %s103, %s104
    %p108 = pneg %p102
    %p109 = scmp.eq.s32.totalorder %s9, 1
    %p110 = por %p108, %p109
    %p111 = scmp.ne.s32.totalorder %s103, %s106
    %p112 = scmp.eq.s32.totalorder %s9, 0
    %p113 = por %p111, %p112
    %p114 = scmp.ne.s32.totalorder %s103, %s106
    %p115 = scmp.eq.s32.totalorder %s14, 1
    %p116 = por %p114, %p115
    %p117 = scmp.ne.s32.totalorder %s106, %s107
    %p118 = scmp.eq.s32.totalorder %s14, 0
    %p119 = por %p117, %p118
    %p120 = scmp.ne.s32.totalorder %s106, %s107
    %p121 = scmp.eq.s32.totalorder %s15, 1
    %p122 = por %p120, %p121
    %p124 = scmp.ne.s32.totalorder %s107, %s123
    %p125 = scmp.eq.s32.totalorder %s15, 0
    %p126 = por %p124, %p125
    %p127 = scmp.le.s32.totalorder 1, %s9
    %p128 = scmp.lt.s32.totalorder %s9, 3
    %p129 = pnand %p127, %p128
    %p130 = pneg %p129
    // Predicated region
    $region9: #{conv_block_forward.3} parent=5 // pred_check
      _
    $region10: #{conv_block_forward.3} parent=5 // pred_check_branch
      %132 = sbr.rel (%p129) target = $region12
    $region11: #{conv_block_forward.3} parent=5 // pred_region
      %s133 = ssub.s32 %s9, 1
      // Predicated region
      $region13: #{conv_block_forward.3} parent=11 // pred_check
        %p134 = pneg %p70
      $region14: #{conv_block_forward.3} parent=11 // pred_check_branch
        %136 = sbr.rel (%p134) target = $region16
      $region15: #{conv_block_forward.3} parent=11 // pred_region
        _
      $region16: #{conv_block_forward.3} parent=11 // pred_fallthru
        _
      // Predicated region
      $region17: #{conv_block_forward.3} parent=11 // pred_check
        %p137 = pneg %p91
      $region18: #{conv_block_forward.3} parent=11 // pred_check_branch
        %139 = sbr.rel (%p137) target = $region20
      $region19: #{conv_block_forward.3} parent=11 // pred_region
        _
      $region20: #{conv_block_forward.3} parent=11 // pred_fallthru
        _
    $region12: #{conv_block_forward.3} parent=5 // pred_fallthru
      _
    %p140 = scmp.lt.s32.totalorder %s9, 2
    // Predicated region
    $region21: #{conv_block_forward.3} parent=5 // pred_check
      %p141 = pneg %p140
    $region22: #{conv_block_forward.3} parent=5 // pred_check_branch
      %143 = sbr.rel (%p141) target = $region24
    $region23: #{conv_block_forward.3} parent=5 // pred_region
      // Predicated region
      $region25: #{conv_block_forward.3} parent=23 // pred_check
        %p144 = pneg %p43
      $region26: #{conv_block_forward.3} parent=23 // pred_check_branch
        %146 = sbr.rel (%p144) target = $region28
      $region27: #{conv_block_forward.3} parent=23 // pred_region
        %s147 = smul.u32 2, %s17
        %p148 = scmp.lt.s32.totalorder %s16, 1
        %s149 = scalar_select %p148, %s16, 1
        %p150 = scmp.lt.s32.totalorder %s147, 1
        %s151 = scalar_select %p150, %s147, 1
        %s152 = smul.addr %s149, 2
        %s153 = sadd.s32 %s151, %s152
        %s154 = smul.addr %s153, 4
        %s155 = scalar_lea.vmem %s0, %s154
        %s156 = smul.u32 2, %s17
      $region28: #{conv_block_forward.3} parent=23 // pred_fallthru
        _
    $region24: #{conv_block_forward.3} parent=5 // pred_fallthru
      _
    %p157 = scmp.le.s32.totalorder 1, %s9
    %p158 = scmp.lt.s32.totalorder %s9, 3
    %p159 = pnand %p157, %p158
    %p160 = pneg %p159
    // Predicated region
    $region29: #{conv_block_forward.3} parent=5 // pred_check
      _
    $region30: #{conv_block_forward.3} parent=5 // pred_check_branch
      %162 = sbr.rel (%p159) target = $region32
    $region31: #{conv_block_forward.3} parent=5 // pred_region
      %s163 = ssub.s32 %s9, 1
      %s164 = smul.u32 2, %s19
      %p165 = scmp.lt.s32.totalorder %s18, 1
      %s166 = scalar_select %p165, %s18, 1
      %p167 = scmp.lt.s32.totalorder %s164, 1
      %s168 = scalar_select %p167, %s164, 1
      %s169 = smul.addr %s166, 2
      %s170 = sadd.s32 %s168, %s169
      %s171 = smul.addr %s170, 4
      %s172 = scalar_lea.vmem %s0, %s171
      %p173 = pneg %p49
      %p174 = pneg %p46
      %p175 = pneg %p70
      %p176 = pneg %p67
      %p177 = pneg %p91
      %p178 = pneg %p88
      %p179 = pneg %p119
      %p180 = pneg %p116
      %s181 = smul.u32 2, %s19
      %p182 = scmp.lt.s32.totalorder %s18, 1
      %s183 = scalar_select %p182, %s18, 1
      %p184 = scmp.lt.s32.totalorder %s181, 1
      %s185 = scalar_select %p184, %s181, 1
      %s186 = smul.addr %s183, 2
      %s187 = sadd.s32 %s185, %s186
      %s188 = smul.addr %s187, 8
      %s189 = scalar_lea.vmem %s3, %s188
      %s190 = smul.u32 2, %s19
      %p191 = scmp.lt.s32.totalorder %s18, 1
      %s192 = scalar_select %p191, %s18, 1
      %p193 = scmp.lt.s32.totalorder %s190, 1
      %s194 = scalar_select %p193, %s190, 1
      %s195 = smul.addr %s192, 2
      %s196 = sadd.s32 %s194, %s195
      %s197 = smul.addr %s196, 4
      %s198 = scalar_lea.vmem %s0, %s197
      %s199 = smul.u32 2, %s19
      %s200 = smul.u32 2, %s19
      %p201 = scmp.lt.s32.totalorder %s18, 1
      %s202 = scalar_select %p201, %s18, 1
      %p203 = scmp.lt.s32.totalorder %s200, 1
      %s204 = scalar_select %p203, %s200, 1
      %s205 = smul.addr %s202, 2
      %s206 = sadd.s32 %s204, %s205
      %s207 = smul.addr %s206, 8
      %s208 = scalar_lea.vmem %s3, %s207
      %s209 = smul.u32 2, %s19
      %v210 = vld [vmem:[%s198] sm:$0xff]
      %v211 = vunpack.c.l.bf16 %v210
      %v212 = vunpack.c.h.bf16 %v210
      %v213 = vld [vmem:[%s1] sm:$0xff]
      %215 = vset.pattern.permute.xlu0 0
      %216 = vperm.xlu0 %215, %v213
      %v217 = vpop.permute.xlu0 %216
      %v219 = vmul.f32 %v211, %v217
      %v220 = vmul.f32 %v212, %v217
      %v221 = vld [vmem:[%s2] sm:$0xff]
      %223 = vset.pattern.permute.xlu0 0
      %224 = vperm.xlu0 %223, %v221
      %v225 = vpop.permute.xlu0 %224
      %v227 = vadd.f32 %v219, %v225
      %v228 = vadd.f32 %v220, %v225
      %v229 = vmax.f32 %v227, 0.0
      %v230 = vmax.f32 %v228, 0.0
      %231 = vst [vmem:[%s208] sm:$0xff] %v229
      %232 = vst [vmem:[%s208 + $0x8] sm:$0xff] %v230
      %s233 = smul.u32 2, %s19
      %p234 = scmp.lt.s32.totalorder %s18, 1
      %s235 = scalar_select %p234, %s18, 1
      %p236 = scmp.lt.s32.totalorder %s233, 1
      %s237 = scalar_select %p236, %s233, 1
      %s238 = smul.addr %s235, 2
      %s239 = sadd.s32 %s237, %s238
      %s240 = smul.addr %s239, 8
      %s241 = scalar_lea.vmem %s3, %s240
      // Predicated region
      $region33: #{conv_block_forward.3} parent=31 // pred_check
        %p242 = pneg %p116
      $region34: #{conv_block_forward.3} parent=31 // pred_check_branch
        %244 = sbr.rel (%p242) target = $region36
      $region35: #{conv_block_forward.3} parent=31 // pred_region
        %s245 = smul.u32 2, %s19
      $region36: #{conv_block_forward.3} parent=31 // pred_fallthru
        _
    $region32: #{conv_block_forward.3} parent=5 // pred_fallthru
      _
    %p246 = scmp.le.s32.totalorder 2, %s9
    // Predicated region
    $region37: #{conv_block_forward.3} parent=5 // pred_check
      %p247 = pneg %p246
    $region38: #{conv_block_forward.3} parent=5 // pred_check_branch
      %249 = sbr.rel (%p247) target = $region40
    $region39: #{conv_block_forward.3} parent=5 // pred_region
      %s250 = ssub.s32 %s9, 2
      // Predicated region
      $region41: #{conv_block_forward.3} parent=39 // pred_check
        %p251 = pneg %p122
      $region42: #{conv_block_forward.3} parent=39 // pred_check_branch
        %253 = sbr.rel (%p251) target = $region44
      $region43: #{conv_block_forward.3} parent=39 // pred_region
        %s254 = smul.u32 2, %s21
        %p255 = scmp.lt.s32.totalorder %s20, 1
        %s256 = scalar_select %p255, %s20, 1
        %p257 = scmp.lt.s32.totalorder %s254, 1
        %s258 = scalar_select %p257, %s254, 1
        %s259 = smul.addr %s256, 2
        %s260 = sadd.s32 %s258, %s259
        %s261 = smul.addr %s260, 8
        %s262 = scalar_lea.vmem %s3, %s261
      $region44: #{conv_block_forward.3} parent=39 // pred_fallthru
        _
    $region40: #{conv_block_forward.3} parent=5 // pred_fallthru
      _
  $region6: #{conv_block_forward.3} parent=0 // loop_footer
    %s13 = sadd.s32 1, %s9
  $region7: #{conv_block_forward.3} parent=0 // loop_footer_branch
    %8 = sbr.rel target = $region3
  $region8: #{conv_block_forward.3} parent=0 // loop_exit
    _

// kernel: conv_block_forward.2
$region0: #{conv_block_forward.2}
  #allocation0 [shape = 'u32[]', space=smem, size = 0x4, offset = 0x4, fixed_abs, tag = 'smem constant byte address 0x4 - core index']
  #allocation1 [shape = 'u32[144,128]{1,0:T(1,128)}', space=vmem, size = 0x12000, scoped, tag = 'internal scratch']
  %s0 = inlined_call_operand.vmem [shape: bf16[2,18,18,4], index: 0, kind: input, shape index: {}]
  %s1 = inlined_call_operand.vmem [shape: bf16[36,128], index: 1, kind: input, shape index: {}]
  %s2 = inlined_call_operand.vmem [shape: bf16[2,8,256], index: 2, kind: output, shape index: {0}]
  %s3 = inlined_call_operand.vmem [shape: f32[4,1,128], index: 3, kind: output, shape index: {1}]
  %s4 = inlined_call_operand.vmem [shape: f32[4,1,128], index: 4, kind: output, shape index: {2}]
  %5 = xla_tuple %s2, %s3, %s4
  %s6 = sld [smem:[#allocation0]]
  $region57: #{conv_block_forward.2} parent=0
    _
  %s8 = ssub.s32 1, %s6
  %s9 = scalar_select 0, %s8, %s6
  loop: start=0, step=1, limit=6
  $region2: #{conv_block_forward.2} parent=0 // loop_pre_header
    _
  $region3: #{conv_block_forward.2} parent=0 // loop_header
    %s11 = sphi 0, %s15
    %p12 = scmp.ge.s32.totalorder %s11, 6
    %s18 = sphi 0, %s30
    %s19 = sphi 0, %s26
    %s20 = sphi 0, %s18
    %s21 = sphi 0, %s19
    %s22 = sphi 0, %s20
    %s23 = sphi 0, %s21
    %s33 = sphi 0, %s35
    %s36 = sphi 0, %s33
    %s37 = sphi 0, %s36
    %s53 = sphi 0, %s37
    %s57 = sphi 0, %s57
    %s59 = sphi 0, %s57
    %s60 = sphi 0, %s59
    %s74 = sphi 0, %s60
    %s82 = sphi 0, %s84
    %s85 = sphi 0, %s82
    %s86 = sphi 0, %s85
    %s102 = sphi 0, %s86
    %s112 = sphi 0, %s114
    %s115 = sphi 0, %s112
    %s116 = sphi 0, %s115
    %s132 = sphi 0, %s116
    %s142 = sphi 0, %s144
    %s145 = sphi 0, %s142
    %s146 = sphi 0, %s145
    %s162 = sphi 0, %s146
  $region4: #{conv_block_forward.2} parent=0 // loop_header_branch
    %14 = sbr.rel (%p12) target = $region8
  $region5: #{conv_block_forward.2} parent=0 // loop_body
    %s16 = ssub.s32 %s11, 1
    %s17 = ssub.s32 %s11, 2
    %s24 = sadd.s32 1, %s19
    %p25 = scmp.ge.s32.totalorder %s24, 2
    %s26 = scalar_select %p25, 0, %s24
    %s27 = sadd.s32 1, %s18
    %s28 = scalar_select %p25, %s27, %s18
    %p29 = scmp.ge.s32.totalorder %s28, 2
    %s30 = scalar_select %p29, 0, %s28
    %s31 = ssub.s32 %s18, %s30
    %p32 = scmp.eq.s32.totalorder %s31, 0
    %s34 = sadd.s32 %s33, 1
    %s35 = scalar_select %p32, %s33, %s34
    %p38 = pneg %p32
    %p39 = scmp.eq.s32.totalorder %s11, 3
    %p40 = por %p38, %p39
    %p41 = scmp.ne.s32.totalorder %s33, %s36
    %p42 = scmp.eq.s32.totalorder %s11, 0
    %p43 = por %p41, %p42
    %p44 = scmp.ne.s32.totalorder %s33, %s36
    %p45 = scmp.eq.s32.totalorder %s16, 3
    %p46 = por %p44, %p45
    %p47 = scmp.ne.s32.totalorder %s36, %s37
    %p48 = scmp.eq.s32.totalorder %s16, 0
    %p49 = por %p47, %p48
    %p50 = scmp.ne.s32.totalorder %s36, %s37
    %p51 = scmp.eq.s32.totalorder %s17, 3
    %p52 = por %p50, %p51
    %p54 = scmp.ne.s32.totalorder %s37, %s53
    %p55 = scmp.eq.s32.totalorder %s17, 0
    %p56 = por %p54, %p55
    %s58 = sadd.s32 %s57, 1
    %p61 = scmp.eq.s32.totalorder %s11, 3
    %p62 = scmp.ne.s32.totalorder %s57, %s59
    %p63 = scmp.eq.s32.totalorder %s11, 0
    %p64 = por %p62, %p63
    %p65 = scmp.ne.s32.totalorder %s57, %s59
    %p66 = scmp.eq.s32.totalorder %s16, 3
    %p67 = por %p65, %p66
    %p68 = scmp.ne.s32.totalorder %s59, %s60
    %p69 = scmp.eq.s32.totalorder %s16, 0
    %p70 = por %p68, %p69
    %p71 = scmp.ne.s32.totalorder %s59, %s60
    %p72 = scmp.eq.s32.totalorder %s17, 3
    %p73 = por %p71, %p72
    %p75 = scmp.ne.s32.totalorder %s60, %s74
    %p76 = scmp.eq.s32.totalorder %s17, 0
    %p77 = por %p75, %p76
    %s78 = ssub.s32 %s18, %s30
    %s79 = ssub.s32 %s19, %s26
    %s80 = sor.u32 %s78, %s79
    %p81 = scmp.eq.s32.totalorder %s80, 0
    %s83 = sadd.s32 %s82, 1
    %s84 = scalar_select %p81, %s82, %s83
    %p87 = pneg %p81
    %p88 = scmp.eq.s32.totalorder %s11, 3
    %p89 = por %p87, %p88
    %p90 = scmp.ne.s32.totalorder %s82, %s85
    %p91 = scmp.eq.s32.totalorder %s11, 0
    %p92 = por %p90, %p91
    %p93 = scmp.ne.s32.totalorder %s82, %s85
    %p94 = scmp.eq.s32.totalorder %s16, 3
    %p95 = por %p93, %p94
    %p96 = scmp.ne.s32.totalorder %s85, %s86
    %p97 = scmp.eq.s32.totalorder %s16, 0
    %p98 = por %p96, %p97
    %p99 = scmp.ne.s32.totalorder %s85, %s86
    %p100 = scmp.eq.s32.totalorder %s17, 3
    %p101 = por %p99, %p100
    %p103 = scmp.ne.s32.totalorder %s86, %s102
    %p104 = scmp.eq.s32.totalorder %s17, 0
    %p105 = por %p103, %p104
    %s106 = smul.u32 %s18, 2
    %s107 = sadd.s32 %s106, %s19
    %s108 = smul.u32 %s30, 2
    %s109 = sadd.s32 %s108, %s26
    %s110 = ssub.s32 %s107, %s109
    %p111 = scmp.eq.s32.totalorder %s110, 0
    %s113 = sadd.s32 %s112, 1
    %s114 = scalar_select %p111, %s112, %s113
    %p117 = pneg %p111
    %p118 = scmp.eq.s32.totalorder %s11, 3
    %p119 = por %p117, %p118
    %p120 = scmp.ne.s32.totalorder %s112, %s115
    %p121 = scmp.eq.s32.totalorder %s11, 0
    %p122 = por %p120, %p121
    %p123 = scmp.ne.s32.totalorder %s112, %s115
    %p124 = scmp.eq.s32.totalorder %s16, 3
    %p125 = por %p123, %p124
    %p126 = scmp.ne.s32.totalorder %s115, %s116
    %p127 = scmp.eq.s32.totalorder %s16, 0
    %p128 = por %p126, %p127
    %p129 = scmp.ne.s32.totalorder %s115, %s116
    %p130 = scmp.eq.s32.totalorder %s17, 3
    %p131 = por %p129, %p130
    %p133 = scmp.ne.s32.totalorder %s116, %s132
    %p134 = scmp.eq.s32.totalorder %s17, 0
    %p135 = por %p133, %p134
    %s136 = smul.u32 %s18, 2
    %s137 = sadd.s32 %s136, %s19
    %s138 = smul.u32 %s30, 2
    %s139 = sadd.s32 %s138, %s26
    %s140 = ssub.s32 %s137, %s139
    %p141 = scmp.eq.s32.totalorder %s140, 0
    %s143 = sadd.s32 %s142, 1
    %s144 = scalar_select %p141, %s142, %s143
    %p147 = pneg %p141
    %p148 = scmp.eq.s32.totalorder %s11, 3
    %p149 = por %p147, %p148
    %p150 = scmp.ne.s32.totalorder %s142, %s145
    %p151 = scmp.eq.s32.totalorder %s11, 0
    %p152 = por %p150, %p151
    %p153 = scmp.ne.s32.totalorder %s142, %s145
    %p154 = scmp.eq.s32.totalorder %s16, 3
    %p155 = por %p153, %p154
    %p156 = scmp.ne.s32.totalorder %s145, %s146
    %p157 = scmp.eq.s32.totalorder %s16, 0
    %p158 = por %p156, %p157
    %p159 = scmp.ne.s32.totalorder %s145, %s146
    %p160 = scmp.eq.s32.totalorder %s17, 3
    %p161 = por %p159, %p160
    %p163 = scmp.ne.s32.totalorder %s146, %s162
    %p164 = scmp.eq.s32.totalorder %s17, 0
    %p165 = por %p163, %p164
    %p166 = scmp.le.s32.totalorder 1, %s11
    %p167 = scmp.lt.s32.totalorder %s11, 5
    %p168 = pnand %p166, %p167
    %p169 = pneg %p168
    // Predicated region
    $region9: #{conv_block_forward.2} parent=5 // pred_check
      _
    $region10: #{conv_block_forward.2} parent=5 // pred_check_branch
      %171 = sbr.rel (%p168) target = $region12
    $region11: #{conv_block_forward.2} parent=5 // pred_region
      %s172 = ssub.s32 %s11, 1
      // Predicated region
      $region13: #{conv_block_forward.2} parent=11 // pred_check
        %p173 = pneg %p70
      $region14: #{conv_block_forward.2} parent=11 // pred_check_branch
        %175 = sbr.rel (%p173) target = $region16
      $region15: #{conv_block_forward.2} parent=11 // pred_region
        _
      $region16: #{conv_block_forward.2} parent=11 // pred_fallthru
        _
    $region12: #{conv_block_forward.2} parent=5 // pred_fallthru
      _
    %p176 = scmp.lt.s32.totalorder %s11, 4
    // Predicated region
    $region17: #{conv_block_forward.2} parent=5 // pred_check
      %p177 = pneg %p176
    $region18: #{conv_block_forward.2} parent=5 // pred_check_branch
      %179 = sbr.rel (%p177) target = $region20
    $region19: #{conv_block_forward.2} parent=5 // pred_region
      // Predicated region
      $region21: #{conv_block_forward.2} parent=19 // pred_check
        %p180 = pneg %p43
      $region22: #{conv_block_forward.2} parent=19 // pred_check_branch
        %182 = sbr.rel (%p180) target = $region24
      $region23: #{conv_block_forward.2} parent=19 // pred_region
        %p183 = scmp.lt.s32.totalorder %s18, 1
        %s184 = scalar_select %p183, %s18, 1
        %s185 = smul.addr %s184, 54
        %s186 = smul.addr %s185, 4
        %s187 = scalar_lea.vmem %s0, %s186
      $region24: #{conv_block_forward.2} parent=19 // pred_fallthru
        _
    $region20: #{conv_block_forward.2} parent=5 // pred_fallthru
      _
    %p188 = scmp.le.s32.totalorder 1, %s11
    %p189 = scmp.lt.s32.totalorder %s11, 5
    %p190 = pnand %p188, %p189
    %p191 = pneg %p190
    // Predicated region
    $region25: #{conv_block_forward.2} parent=5 // pred_check
      _
    $region26: #{conv_block_forward.2} parent=5 // pred_check_branch
      %193 = sbr.rel (%p190) target = $region28
    $region27: #{conv_block_forward.2} parent=5 // pred_region
      %s194 = ssub.s32 %s11, 1
      %p195 = scmp.lt.s32.totalorder %s20, 1
      %s196 = scalar_select %p195, %s20, 1
      %s197 = smul.addr %s196, 54
      %s198 = smul.addr %s197, 4
      %s199 = scalar_lea.vmem %s0, %s198
      %p200 = pneg %p49
      %p201 = pneg %p46
      %p202 = pneg %p70
      %p203 = pneg %p67
      %p204 = pneg %p98
      %p205 = pneg %p95
      %p206 = scmp.lt.s32.totalorder %s20, 1
      %s207 = scalar_select %p206, %s20, 1
      %p208 = scmp.lt.s32.totalorder %s21, 1
      %s209 = scalar_select %p208, %s21, 1
      %s210 = smul.addr %s207, 2
      %s211 = sadd.s32 %s209, %s210
      %s212 = smul.addr %s211, 4
      %s213 = scalar_lea.vmem %s2, %s212
      %p214 = pneg %p128
      %p215 = pneg %p125
      %s216 = smul.u32 %s20, 2
      %s217 = sadd.s32 %s216, %s21
      %p218 = scmp.lt.s32.totalorder %s217, 3
      %s219 = scalar_select %p218, %s217, 3
      %s220 = scalar_lea.vmem %s3, %s219
      %p221 = pneg %p158
      %p222 = pneg %p155
      %s223 = smul.u32 %s20, 2
      %s224 = sadd.s32 %s223, %s21
      %p225 = scmp.lt.s32.totalorder %s224, 3
      %s226 = scalar_select %p225, %s224, 3
      %s227 = scalar_lea.vmem %s4, %s226
      %p228 = scmp.lt.s32.totalorder %s20, 1
      %s229 = scalar_select %p228, %s20, 1
      %s230 = smul.addr %s229, 54
      %s231 = smul.addr %s230, 4
      %s232 = scalar_lea.vmem %s0, %s231
      %p233 = scmp.lt.s32.totalorder %s20, 1
      %s234 = scalar_select %p233, %s20, 1
      %p235 = scmp.lt.s32.totalorder %s21, 1
      %s236 = scalar_select %p235, %s21, 1
      %s237 = smul.addr %s234, 2
      %s238 = sadd.s32 %s236, %s237
      %s239 = smul.addr %s238, 4
      %s240 = scalar_lea.vmem %s2, %s239
      %s241 = smul.u32 %s20, 2
      %s242 = sadd.s32 %s241, %s21
      %p243 = scmp.lt.s32.totalorder %s242, 3
      %s244 = scalar_select %p243, %s242, 3
      %s245 = scalar_lea.vmem %s3, %s244
      %s246 = smul.u32 %s20, 2
      %s247 = sadd.s32 %s246, %s21
      %s248 = smul.u32 %s20, 2
      %s249 = sadd.s32 %s248, %s21
      %p250 = scmp.lt.s32.totalorder %s249, 3
      %s251 = scalar_select %p250, %s249, 3
      %s252 = scalar_lea.vmem %s4, %s251
      %s253 = smul.u32 %s20, 2
      %s254 = sadd.s32 %s253, %s21
      %s256 = smul.u32 %s21, 8
      %s257 = smul.u32 %s256, 3
      %s258 = smul.addr %s257, 4
      %s259 = scalar_lea.vmem %s232, %s258
      %v260 = vld [vmem:[%s259] sm:$0xf]
      %v261 = vld [vmem:[%s259 + $0x4] sm:$0xf]
      %v262 = vld [vmem:[%s259 + $0x8] sm:$0x1]
      %v263 = vld [vmem:[%s259 + $0xc] sm:$0xf]
      %v264 = vld [vmem:[%s259 + $0x10] sm:$0xf]
      %v265 = vld [vmem:[%s259 + $0x14] sm:$0x1]
      %v266 = vld [vmem:[%s259 + $0x18] sm:$0xf]
      %v267 = vld [vmem:[%s259 + $0x1c] sm:$0xf]
      %v268 = vld [vmem:[%s259 + $0x20] sm:$0x1]
      %v269 = vld [vmem:[%s259 + $0x24] sm:$0xf]
      %v270 = vld [vmem:[%s259 + $0x28] sm:$0xf]
      %v271 = vld [vmem:[%s259 + $0x2c] sm:$0x1]
      %v272 = vld [vmem:[%s259 + $0x30] sm:$0xf]
      %v273 = vld [vmem:[%s259 + $0x34] sm:$0xf]
      %v274 = vld [vmem:[%s259 + $0x38] sm:$0x1]
      %v275 = vld [vmem:[%s259 + $0x3c] sm:$0xf]
      %v276 = vld [vmem:[%s259 + $0x40] sm:$0xf]
      %v277 = vld [vmem:[%s259 + $0x44] sm:$0x1]
      %v278 = vld [vmem:[%s259 + $0x48] sm:$0xf]
      %v279 = vld [vmem:[%s259 + $0x4c] sm:$0xf]
      %v280 = vld [vmem:[%s259 + $0x50] sm:$0x1]
      %v281 = vld [vmem:[%s259 + $0x54] sm:$0xf]
      %v282 = vld [vmem:[%s259 + $0x58] sm:$0xf]
      %v283 = vld [vmem:[%s259 + $0x5c] sm:$0x1]
      %v284 = vld [vmem:[%s259 + $0x60] sm:$0xf]
      %v285 = vld [vmem:[%s259 + $0x64] sm:$0xf]
      %v286 = vld [vmem:[%s259 + $0x68] sm:$0x1]
      %v287 = vld [vmem:[%s259 + $0x6c] sm:$0xf]
      %v288 = vld [vmem:[%s259 + $0x70] sm:$0xf]
      %v289 = vld [vmem:[%s259 + $0x74] sm:$0x1]
      %v306 = vunpack.c.l.b16 %v260
      %v307 = vunpack.c.l.b16 %v261
      %v308 = vunpack.c.l.b16 %v263
      %v309 = vunpack.c.l.b16 %v264
      %v310 = vunpack.c.l.b16 %v266
      %v311 = vunpack.c.l.b16 %v267
      %v312 = vunpack.c.l.b16 %v269
      %v313 = vunpack.c.l.b16 %v270
      %v314 = vunpack.c.l.b16 %v272
      %v315 = vunpack.c.l.b16 %v273
      %v316 = vunpack.c.l.b16 %v275
      %v317 = vunpack.c.l.b16 %v276
      %v318 = vunpack.c.l.b16 %v278
      %v319 = vunpack.c.l.b16 %v279
      %v320 = vunpack.c.l.b16 %v281
      %v321 = vunpack.c.l.b16 %v282
      %v322 = vpack.c.b16 %v307, %v306
      %v323 = vpack.c.b16 %v309, %v308
      %v324 = vpack.c.b16 %v311, %v310
      %v325 = vpack.c.b16 %v313, %v312
      %v326 = vpack.c.b16 %v315, %v314
      %v327 = vpack.c.b16 %v317, %v316
      %v328 = vpack.c.b16 %v319, %v318
      %v329 = vpack.c.b16 %v321, %v320
      %v338 = vunpack.c.l.b16 %v262
      %v339 = vunpack.c.l.b16 %v265
      %v340 = vunpack.c.l.b16 %v268
      %v341 = vunpack.c.l.b16 %v271
      %v342 = vunpack.c.l.b16 %v274
      %v343 = vunpack.c.l.b16 %v277
      %v344 = vunpack.c.l.b16 %v280
      %v345 = vunpack.c.l.b16 %v283
      %v346 = vpack.c.b16 %v338, %v338
      %v347 = vpack.c.b16 %v339, %v339
      %v348 = vpack.c.b16 %v340, %v340
      %v349 = vpack.c.b16 %v341, %v341
      %v350 = vpack.c.b16 %v342, %v342
      %v351 = vpack.c.b16 %v343, %v343
      %v352 = vpack.c.b16 %v344, %v344
      %v353 = vpack.c.b16 %v345, %v345
      %vm354 = vsmask.f32 7424
      %v356 = vshrl.u32 %v322, 16
      %v358 = vshll.u32 %v322, 16
      %v360 = vrot.slane %v358, 1
      %v361 = vor.u32 %v356, %v360
      %v363 = vshll.u32 %v346, 16
      %v365 = vrot.slane %v363, 1
      %v366 = vsel %vm354, %v361, %v365
      %v368 = vshrl.u32 %v323, 16
      %v370 = vshll.u32 %v323, 16
      %v372 = vrot.slane %v370, 1
      %v373 = vor.u32 %v368, %v372
      %v375 = vshll.u32 %v347, 16
      %v377 = vrot.slane %v375, 1
      %v378 = vsel %vm354, %v373, %v377
      %v380 = vshrl.u32 %v324, 16
      %v382 = vshll.u32 %v324, 16
      %v384 = vrot.slane %v382, 1
      %v385 = vor.u32 %v380, %v384
      %v387 = vshll.u32 %v348, 16
      %v389 = vrot.slane %v387, 1
      %v390 = vsel %vm354, %v385, %v389
      %v392 = vshrl.u32 %v325, 16
      %v394 = vshll.u32 %v325, 16
      %v396 = vrot.slane %v394, 1
      %v397 = vor.u32 %v392, %v396
      %v399 = vshll.u32 %v349, 16
      %v401 = vrot.slane %v399, 1
      %v402 = vsel %vm354, %v397, %v401
      %v404 = vshrl.u32 %v326, 16
      %v406 = vshll.u32 %v326, 16
      %v408 = vrot.slane %v406, 1
      %v409 = vor.u32 %v404, %v408
      %v411 = vshll.u32 %v350, 16
      %v413 = vrot.slane %v411, 1
      %v414 = vsel %vm354, %v409, %v413
      %v416 = vshrl.u32 %v327, 16
      %v418 = vshll.u32 %v327, 16
      %v420 = vrot.slane %v418, 1
      %v421 = vor.u32 %v416, %v420
      %v423 = vshll.u32 %v351, 16
      %v425 = vrot.slane %v423, 1
      %v426 = vsel %vm354, %v421, %v425
      %v428 = vshrl.u32 %v328, 16
      %v430 = vshll.u32 %v328, 16
      %v432 = vrot.slane %v430, 1
      %v433 = vor.u32 %v428, %v432
      %v435 = vshll.u32 %v352, 16
      %v437 = vrot.slane %v435, 1
      %v438 = vsel %vm354, %v433, %v437
      %v440 = vshrl.u32 %v329, 16
      %v442 = vshll.u32 %v329, 16
      %v444 = vrot.slane %v442, 1
      %v445 = vor.u32 %v440, %v444
      %v447 = vshll.u32 %v353, 16
      %v449 = vrot.slane %v447, 1
      %v450 = vsel %vm354, %v445, %v449
      %451 = vrot.lane.b32.xlu0 %v366, 4
      %v452 = vpop.permute.xlu0 %451
      %453 = vrot.lane.b32.xlu0 %v378, 4
      %v454 = vpop.permute.xlu0 %453
      %455 = vrot.lane.b32.xlu0 %v390, 4
      %v456 = vpop.permute.xlu0 %455
      %457 = vrot.lane.b32.xlu0 %v402, 4
      %v458 = vpop.permute.xlu0 %457
      %459 = vrot.lane.b32.xlu0 %v414, 4
      %v460 = vpop.permute.xlu0 %459
      %461 = vrot.lane.b32.xlu0 %v426, 4
      %v462 = vpop.permute.xlu0 %461
      %463 = vrot.lane.b32.xlu0 %v438, 4
      %v464 = vpop.permute.xlu0 %463
      %465 = vrot.lane.b32.xlu0 %v450, 4
      %v466 = vpop.permute.xlu0 %465
      %vm467 = vcmask 1046528
      %v468 = vrot.slane %v322, 1
      %v469 = vrot.slane %v346, 1
      %v470 = vsel %vm467, %v468, %v469
      %v471 = vrot.slane %v323, 1
      %v472 = vrot.slane %v347, 1
      %v473 = vsel %vm467, %v471, %v472
      %v474 = vrot.slane %v324, 1
      %v475 = vrot.slane %v348, 1
      %v476 = vsel %vm467, %v474, %v475
      %v477 = vrot.slane %v325, 1
      %v478 = vrot.slane %v349, 1
      %v479 = vsel %vm467, %v477, %v478
      %v480 = vrot.slane %v326, 1
      %v481 = vrot.slane %v350, 1
      %v482 = vsel %vm467, %v480, %v481
      %v483 = vrot.slane %v327, 1
      %v484 = vrot.slane %v351, 1
      %v485 = vsel %vm467, %v483, %v484
      %v486 = vrot.slane %v328, 1
      %v487 = vrot.slane %v352, 1
      %v488 = vsel %vm467, %v486, %v487
      %v489 = vrot.slane %v329, 1
      %v490 = vrot.slane %v353, 1
      %v491 = vsel %vm467, %v489, %v490
      %492 = vrot.lane.b32.xlu0 %v470, 8
      %v493 = vpop.permute.xlu0 %492
      %494 = vrot.lane.b32.xlu0 %v473, 8
      %v495 = vpop.permute.xlu0 %494
      %496 = vrot.lane.b32.xlu0 %v476, 8
      %v497 = vpop.permute.xlu0 %496
      %498 = vrot.lane.b32.xlu0 %v479, 8
      %v499 = vpop.permute.xlu0 %498
      %500 = vrot.lane.b32.xlu0 %v482, 8
      %v501 = vpop.permute.xlu0 %500
      %502 = vrot.lane.b32.xlu0 %v485, 8
      %v503 = vpop.permute.xlu0 %502
      %504 = vrot.lane.b32.xlu0 %v488, 8
      %v505 = vpop.permute.xlu0 %504
      %506 = vrot.lane.b32.xlu0 %v491, 8
      %v507 = vpop.permute.xlu0 %506
      %v510 = vunpack.c.l.b16 %v284
      %v511 = vunpack.c.l.b16 %v285
      %v512 = vpack.c.b16 %v511, %v510
      %513 = vrot.lane.b32.xlu0 %v323, 12
      %v514 = vpop.permute.xlu0 %513
      %515 = vrot.lane.b32.xlu0 %v324, 12
      %v516 = vpop.permute.xlu0 %515
      %517 = vrot.lane.b32.xlu0 %v325, 12
      %v518 = vpop.permute.xlu0 %517
      %519 = vrot.lane.b32.xlu0 %v326, 12
      %v520 = vpop.permute.xlu0 %519
      %521 = vrot.lane.b32.xlu0 %v327, 12
      %v522 = vpop.permute.xlu0 %521
      %523 = vrot.lane.b32.xlu0 %v328, 12
      %v524 = vpop.permute.xlu0 %523
      %525 = vrot.lane.b32.xlu0 %v329, 12
      %v526 = vpop.permute.xlu0 %525
      %527 = vrot.lane.b32.xlu0 %v512, 12
      %v528 = vpop.permute.xlu0 %527
      %v530 = vunpack.c.l.b16 %v286
      %v531 = vpack.c.b16 %v530, %v530
      %v533 = vshrl.u32 %v512, 16
      %v535 = vshll.u32 %v512, 16
      %v537 = vrot.slane %v535, 1
      %v538 = vor.u32 %v533, %v537
      %v540 = vshll.u32 %v531, 16
      %v542 = vrot.slane %v540, 1
      %v543 = vsel %vm354, %v538, %v542
      %544 = vrot.lane.b32.xlu0 %v378, 16
      %v545 = vpop.permute.xlu0 %544
      %546 = vrot.lane.b32.xlu0 %v390, 16
      %v547 = vpop.permute.xlu0 %546
      %548 = vrot.lane.b32.xlu0 %v402, 16
      %v549 = vpop.permute.xlu0 %548
      %550 = vrot.lane.b32.xlu0 %v414, 16
      %v551 = vpop.permute.xlu0 %550
      %552 = vrot.lane.b32.xlu0 %v426, 16
      %v553 = vpop.permute.xlu0 %552
      %554 = vrot.lane.b32.xlu0 %v438, 16
      %v555 = vpop.permute.xlu0 %554
      %556 = vrot.lane.b32.xlu0 %v450, 16
      %v557 = vpop.permute.xlu0 %556
      %558 = vrot.lane.b32.xlu0 %v543, 16
      %v559 = vpop.permute.xlu0 %558
      %v560 = vrot.slane %v512, 1
      %v561 = vrot.slane %v531, 1
      %v562 = vsel %vm467, %v560, %v561
      %563 = vrot.lane.b32.xlu0 %v473, 20
      %v564 = vpop.permute.xlu0 %563
      %565 = vrot.lane.b32.xlu0 %v476, 20
      %v566 = vpop.permute.xlu0 %565
      %567 = vrot.lane.b32.xlu0 %v479, 20
      %v568 = vpop.permute.xlu0 %567
      %569 = vrot.lane.b32.xlu0 %v482, 20
      %v570 = vpop.permute.xlu0 %569
      %571 = vrot.lane.b32.xlu0 %v485, 20
      %v572 = vpop.permute.xlu0 %571
      %573 = vrot.lane.b32.xlu0 %v488, 20
      %v574 = vpop.permute.xlu0 %573
      %575 = vrot.lane.b32.xlu0 %v491, 20
      %v576 = vpop.permute.xlu0 %575
      %577 = vrot.lane.b32.xlu0 %v562, 20
      %v578 = vpop.permute.xlu0 %577
      %v581 = vunpack.c.l.b16 %v287
      %v582 = vunpack.c.l.b16 %v288
      %v583 = vpack.c.b16 %v582, %v581
      %584 = vrot.lane.b32.xlu0 %v324, 24
      %v585 = vpop.permute.xlu0 %584
      %586 = vrot.lane.b32.xlu0 %v325, 24
      %v587 = vpop.permute.xlu0 %586
      %588 = vrot.lane.b32.xlu0 %v326, 24
      %v589 = vpop.permute.xlu0 %588
      %590 = vrot.lane.b32.xlu0 %v327, 24
      %v591 = vpop.permute.xlu0 %590
      %592 = vrot.lane.b32.xlu0 %v328, 24
      %v593 = vpop.permute.xlu0 %592
      %594 = vrot.lane.b32.xlu0 %v329, 24
      %v595 = vpop.permute.xlu0 %594
      %596 = vrot.lane.b32.xlu0 %v512, 24
      %v597 = vpop.permute.xlu0 %596
      %598 = vrot.lane.b32.xlu0 %v583, 24
      %v599 = vpop.permute.xlu0 %598
      %v601 = vunpack.c.l.b16 %v289
      %v602 = vpack.c.b16 %v601, %v601
      %v604 = vshrl.u32 %v583, 16
      %v606 = vshll.u32 %v583, 16
      %v608 = vrot.slane %v606, 1
      %v609 = vor.u32 %v604, %v608
      %v611 = vshll.u32 %v602, 16
      %v613 = vrot.slane %v611, 1
      %v614 = vsel %vm354, %v609, %v613
      %615 = vrot.lane.b32.xlu0 %v390, 28
      %v616 = vpop.permute.xlu0 %615
      %617 = vrot.lane.b32.xlu0 %v402, 28
      %v618 = vpop.permute.xlu0 %617
      %619 = vrot.lane.b32.xlu0 %v414, 28
      %v620 = vpop.permute.xlu0 %619
      %621 = vrot.lane.b32.xlu0 %v426, 28
      %v622 = vpop.permute.xlu0 %621
      %623 = vrot.lane.b32.xlu0 %v438, 28
      %v624 = vpop.permute.xlu0 %623
      %625 = vrot.lane.b32.xlu0 %v450, 28
      %v626 = vpop.permute.xlu0 %625
      %627 = vrot.lane.b32.xlu0 %v543, 28
      %v628 = vpop.permute.xlu0 %627
      %629 = vrot.lane.b32.xlu0 %v614, 28
      %v630 = vpop.permute.xlu0 %629
      %v631 = vrot.slane %v583, 1
      %v632 = vrot.slane %v602, 1
      %v633 = vsel %vm467, %v631, %v632
      %634 = vrot.lane.b32.xlu0 %v476, 32
      %v635 = vpop.permute.xlu0 %634
      %636 = vrot.lane.b32.xlu0 %v479, 32
      %v637 = vpop.permute.xlu0 %636
      %638 = vrot.lane.b32.xlu0 %v482, 32
      %v639 = vpop.permute.xlu0 %638
      %640 = vrot.lane.b32.xlu0 %v485, 32
      %v641 = vpop.permute.xlu0 %640
      %642 = vrot.lane.b32.xlu0 %v488, 32
      %v643 = vpop.permute.xlu0 %642
      %644 = vrot.lane.b32.xlu0 %v491, 32
      %v645 = vpop.permute.xlu0 %644
      %646 = vrot.lane.b32.xlu0 %v562, 32
      %v647 = vpop.permute.xlu0 %646
      %648 = vrot.lane.b32.xlu0 %v633, 32
      %v649 = vpop.permute.xlu0 %648
      %vm650 = vcmask 31744
      %v652 = vsel %vm650, %v322, %v452
      %v654 = vsel %vm650, %v323, %v454
      %v656 = vsel %vm650, %v324, %v456
      %v658 = vsel %vm650, %v325, %v458
      %v660 = vsel %vm650, %v326, %v460
      %v662 = vsel %vm650, %v327, %v462
      %v664 = vsel %vm650, %v328, %v464
      %v666 = vsel %vm650, %v329, %v466
      %vm667 = vcmask 64512
      %v669 = vsel %vm667, %v652, %v493
      %v671 = vsel %vm667, %v654, %v495
      %v673 = vsel %vm667, %v656, %v497
      %v675 = vsel %vm667, %v658, %v499
      %v677 = vsel %vm667, %v660, %v501
      %v679 = vsel %vm667, %v662, %v503
      %v681 = vsel %vm667, %v664, %v505
      %v683 = vsel %vm667, %v666, %v507
      %vm684 = vcmask 97280
      %v686 = vsel %vm684, %v669, %v514
      %v688 = vsel %vm684, %v671, %v516
      %v690 = vsel %vm684, %v673, %v518
      %v692 = vsel %vm684, %v675, %v520
      %v694 = vsel %vm684, %v677, %v522
      %v696 = vsel %vm684, %v679, %v524
      %v698 = vsel %vm684, %v681, %v526
      %v700 = vsel %vm684, %v683, %v528
      %vm701 = vcmask 130048
      %v703 = vsel %vm701, %v686, %v545
      %v705 = vsel %vm701, %v688, %v547
      %v707 = vsel %vm701, %v690, %v549
      %v709 = vsel %vm701, %v692, %v551
      %v711 = vsel %vm701, %v694, %v553
      %v713 = vsel %vm701, %v696, %v555
      %v715 = vsel %vm701, %v698, %v557
      %v717 = vsel %vm701, %v700, %v559
      %vm718 = vcmask 162816
      %v720 = vsel %vm718, %v703, %v564
      %v722 = vsel %vm718, %v705, %v566
      %v724 = vsel %vm718, %v707, %v568
      %v726 = vsel %vm718, %v709, %v570
      %v728 = vsel %vm718, %v711, %v572
      %v730 = vsel %vm718, %v713, %v574
      %v732 = vsel %vm718, %v715, %v576
      %v734 = vsel %vm718, %v717, %v578
      %vm735 = vcmask 195584
      %v737 = vsel %vm735, %v720, %v585
      %v739 = vsel %vm735, %v722, %v587
      %v741 = vsel %vm735, %v724, %v589
      %v743 = vsel %vm735, %v726, %v591
      %v745 = vsel %vm735, %v728, %v593
      %v747 = vsel %vm735, %v730, %v595
      %v749 = vsel %vm735, %v732, %v597
      %v751 = vsel %vm735, %v734, %v599
      %vm752 = vcmask 228352
      %v754 = vsel %vm752, %v737, %v616
      %v756 = vsel %vm752, %v739, %v618
      %v758 = vsel %vm752, %v741, %v620
      %v760 = vsel %vm752, %v743, %v622
      %v762 = vsel %vm752, %v745, %v624
      %v764 = vsel %vm752, %v747, %v626
      %v766 = vsel %vm752, %v749, %v628
      %v768 = vsel %vm752, %v751, %v630
      %vm769 = vcmask 261120
      %v771 = vsel %vm769, %v754, %v635
      %v773 = vsel %vm769, %v756, %v637
      %v775 = vsel %vm769, %v758, %v639
      %v777 = vsel %vm769, %v760, %v641
      %v779 = vsel %vm769, %v762, %v643
      %v781 = vsel %vm769, %v764, %v645
      %v783 = vsel %vm769, %v766, %v647
      %v785 = vsel %vm769, %v768, %v649
      %v786 = vld [vmem:[%s1] sm:$0xf]
      %v787 = vld [vmem:[%s1 + $0x4] sm:$0xf]
      %v788 = vld [vmem:[%s1 + $0x8] sm:$0xf]
      %v789 = vld [vmem:[%s1 + $0xc] sm:$0xf]
      %v790 = vld [vmem:[%s1 + $0x10] sm:$0x3]
      %v796 = vunpack.c.l.b16 %v786
      %v797 = vunpack.c.l.b16 %v787
      %v798 = vunpack.c.l.b16 %v788
      %v799 = vunpack.c.l.b16 %v789
      %v800 = vunpack.c.l.b16 %v790
      %v801 = vpack.c.b16 %v797, %v796
      %v802 = vpack.c.b16 %v799, %v798
      %v803 = vpack.c.b16 %v800, %v800
      %vm806 = vcmask 293888
      %v807 = vsel %vm806, %v771, 0
      %v809 = vsel %vm806, %v773, 0
      %v811 = vsel %vm806, %v775, 0
      %v813 = vsel %vm806, %v777, 0
      %v815 = vsel %vm806, %v779, 0
      %v817 = vsel %vm806, %v781, 0
      %v819 = vsel %vm806, %v783, 0
      %v821 = vsel %vm806, %v785, 0
      %vm823 = vcmask 1041408
      %v825 = vsel %vm823, %v803, 0
      %827 = vmatprep.subr.bf16.mxu0 0
      %828 = vmatpush1.bf16.msra.mxu0 %v801
      %829 = vmatprep.subr.bf16.mxu0 0
      %830 = vmatpush1.bf16.msra.mxu0 %v802
      %831 = vmatprep.subr.bf16.mxu0 0
      %832 = vmatpush1.bf16.msra.mxu0 %v825
      %833 = vmatprep.subr.bf16.mxu0 0
      %834 = vmatpush1.bf16.msra.mxu0 0
      %835 = vmatprep.subr.bf16.mxu0 0
      %836 = vmatpush1.bf16.msra.mxu0 0
      %837 = vmatprep.subr.bf16.mxu0 0
      %838 = vmatpush1.bf16.msra.mxu0 0
      %839 = vmatprep.subr.bf16.mxu0 0
      %840 = vmatpush1.bf16.msra.mxu0 0
      %841 = vmatprep.subr.bf16.mxu0 0
      %842 = vmatpush1.bf16.msra.mxu0 0
      %843 = vmatprep.subr.bf16.mxu0 0
      %844 = vmatpush1.bf16.msra.mxu0 0
      %845 = vmatprep.subr.bf16.mxu0 0
      %846 = vmatpush1.bf16.msra.mxu0 0
      %847 = vmatprep.subr.bf16.mxu0 0
      %848 = vmatpush1.bf16.msra.mxu0 0
      %849 = vmatprep.subr.bf16.mxu0 0
      %850 = vmatpush1.bf16.msra.mxu0 0
      %851 = vmatprep.subr.bf16.mxu0 0
      %852 = vmatpush1.bf16.msra.mxu0 0
      %853 = vmatprep.subr.bf16.mxu0 0
      %854 = vmatpush1.bf16.msra.mxu0 0
      %855 = vmatprep.subr.bf16.mxu0 0
      %856 = vmatpush1.bf16.msra.mxu0 0
      %857 = vmatprep.subr.bf16.mxu0 0
      %858 = vmatpush1.bf16.msra.mxu0 0
      %859 = vmatprep.mubr.bf16.mxu0 0
      %860 = vmatmul.mubr.bf16.gmra.mrb[0].mxu0 %v807
      %v861 = vpop.f32.mrb[0].mxu0
      %v862 = vadd.f32 0.0, %v861
      %v863 = vpop.f32.mrb[0].mxu0
      %v864 = vpop.f32.mrb[0].mxu0
      %v865 = vadd.f32 0.0, %v864
      %v866 = vpop.f32.mrb[0].mxu0
      %867 = vmatprep.mubr.bf16.mxu0 0
      %868 = vmatmul.mubr.bf16.gmra.mrb[0].mxu0 %v809
      %v869 = vpop.f32.mrb[0].mxu0
      %v870 = vadd.f32 0.0, %v869
      %v871 = vpop.f32.mrb[0].mxu0
      %v872 = vpop.f32.mrb[0].mxu0
      %v873 = vadd.f32 0.0, %v872
      %v874 = vpop.f32.mrb[0].mxu0
      %875 = vmatprep.mubr.bf16.mxu0 0
      %876 = vmatmul.mubr.bf16.gmra.mrb[0].mxu0 %v811
      %v877 = vpop.f32.mrb[0].mxu0
      %v878 = vadd.f32 0.0, %v877
      %v879 = vpop.f32.mrb[0].mxu0
      %v880 = vpop.f32.mrb[0].mxu0
      %v881 = vadd.f32 0.0, %v880
      %v882 = vpop.f32.mrb[0].mxu0
      %883 = vmatprep.mubr.bf16.mxu0 0
      %884 = vmatmul.mubr.bf16.gmra.mrb[0].mxu0 %v813
      %v885 = vpop.f32.mrb[0].mxu0
      %v886 = vadd.f32 0.0, %v885
      %v887 = vpop.f32.mrb[0].mxu0
      %v888 = vpop.f32.mrb[0].mxu0
      %v889 = vadd.f32 0.0, %v888
      %v890 = vpop.f32.mrb[0].mxu0
      %891 = vmatprep.mubr.bf16.mxu0 0
      %892 = vmatmul.mubr.bf16.gmra.mrb[0].mxu0 %v815
      %v893 = vpop.f32.mrb[0].mxu0
      %v894 = vadd.f32 0.0, %v893
      %v895 = vpop.f32.mrb[0].mxu0
      %v896 = vpop.f32.mrb[0].mxu0
      %v897 = vadd.f32 0.0, %v896
      %v898 = vpop.f32.mrb[0].mxu0
      %899 = vmatprep.mubr.bf16.mxu0 0
      %900 = vmatmul.mubr.bf16.gmra.mrb[0].mxu0 %v817
      %v901 = vpop.f32.mrb[0].mxu0
      %v902 = vadd.f32 0.0, %v901
      %v903 = vpop.f32.mrb[0].mxu0
      %v904 = vpop.f32.mrb[0].mxu0
      %v905 = vadd.f32 0.0, %v904
      %v906 = vpop.f32.mrb[0].mxu0
      %907 = vmatprep.mubr.bf16.mxu0 0
      %908 = vmatmul.mubr.bf16.gmra.mrb[0].mxu0 %v819
      %v909 = vpop.f32.mrb[0].mxu0
      %v910 = vadd.f32 0.0, %v909
      %v911 = vpop.f32.mrb[0].mxu0
      %v912 = vpop.f32.mrb[0].mxu0
      %v913 = vadd.f32 0.0, %v912
      %v914 = vpop.f32.mrb[0].mxu0
      %915 = vmatprep.mubr.bf16.mxu0 0
      %916 = vmatmul.mubr.bf16.gmra.mrb[0].mxu0 %v821
      %v917 = vpop.f32.mrb[0].mxu0
      %v918 = vadd.f32 0.0, %v917
      %v919 = vpop.f32.mrb[0].mxu0
      %v920 = vpop.f32.mrb[0].mxu0
      %v921 = vadd.f32 0.0, %v920
      %v922 = vpop.f32.mrb[0].mxu0
      %923 = vdwg.mxu0
      %v924 = vadd.f32 %v862, %v865
      %v925 = vadd.f32 %v924, %v870
      %v926 = vadd.f32 %v925, %v873
      %v927 = vadd.f32 %v926, %v878
      %v928 = vadd.f32 %v927, %v881
      %v929 = vadd.f32 %v928, %v886
      %v930 = vadd.f32 %v929, %v889
      %v931 = vadd.f32 %v930, %v894
      %v932 = vadd.f32 %v931, %v897
      %v933 = vadd.f32 %v932, %v902
      %v934 = vadd.f32 %v933, %v905
      %v935 = vadd.f32 %v934, %v910
      %v936 = vadd.f32 %v935, %v913
      %v937 = vadd.f32 %v936, %v918
      %v938 = vadd.f32 %v937, %v921
      %v939 = vrot.slane %v938, 4
      %v940 = vadd.f32 %v938, %v939
      %v941 = vrot.slane %v940, 2
      %v942 = vadd.f32 %v940, %v941
      %v943 = vrot.slane %v942, 1
      %v944 = vadd.f32 %v942, %v943
      %945 = vst [vmem:[%s245] sm:$0x1] %v944
      %v946 = vmul.f32 %v862, %v862
      %v947 = vmul.f32 %v865, %v865
      %v948 = vmul.f32 %v870, %v870
      %v949 = vmul.f32 %v873, %v873
      %v950 = vmul.f32 %v878, %v878
      %v951 = vmul.f32 %v881, %v881
      %v952 = vmul.f32 %v886, %v886
      %v953 = vmul.f32 %v889, %v889
      %v954 = vmul.f32 %v894, %v894
      %v955 = vmul.f32 %v897, %v897
      %v956 = vmul.f32 %v902, %v902
      %v957 = vmul.f32 %v905, %v905
      %v958 = vmul.f32 %v910, %v910
      %v959 = vmul.f32 %v913, %v913
      %v960 = vmul.f32 %v918, %v918
      %v961 = vmul.f32 %v921, %v921
      %v962 = vadd.f32 %v946, %v947
      %v963 = vadd.f32 %v962, %v948
      %v964 = vadd.f32 %v963, %v949
      %v965 = vadd.f32 %v964, %v950
      %v966 = vadd.f32 %v965, %v951
      %v967 = vadd.f32 %v966, %v952
      %v968 = vadd.f32 %v967, %v953
      %v969 = vadd.f32 %v968, %v954
      %v970 = vadd.f32 %v969, %v955
      %v971 = vadd.f32 %v970, %v956
      %v972 = vadd.f32 %v971, %v957
      %v973 = vadd.f32 %v972, %v958
      %v974 = vadd.f32 %v973, %v959
      %v975 = vadd.f32 %v974, %v960
      %v976 = vadd.f32 %v975, %v961
      %v977 = vrot.slane %v976, 4
      %v978 = vadd.f32 %v976, %v977
      %v979 = vrot.slane %v978, 2
      %v980 = vadd.f32 %v978, %v979
      %v981 = vrot.slane %v980, 1
      %v982 = vadd.f32 %v980, %v981
      %983 = vst [vmem:[%s252] sm:$0x1] %v982
      %984 = vxpose.xlu0.b32.start [1/16] %v862, 128
      %985 = vxpose.xlu0.b32.cont [2/16] %v865, 128
      %986 = vxpose.xlu0.b32.cont [3/16] %v870, 128
      %987 = vxpose.xlu0.b32.cont [4/16] %v873, 128
      %988 = vxpose.xlu0.b32.cont [5/16] %v878, 128
      %989 = vxpose.xlu0.b32.cont [6/16] %v881, 128
      %990 = vxpose.xlu0.b32.cont [7/16] %v886, 128
      %991 = vxpose.xlu0.b32.cont [8/16] %v889, 128
      %992 = vxpose.xlu0.b32.cont [9/16] %v894, 128
      %993 = vxpose.xlu0.b32.cont [10/16] %v897, 128
      %994 = vxpose.xlu0.b32.cont [11/16] %v902, 128
      %995 = vxpose.xlu0.b32.cont [12/16] %v905, 128
      %996 = vxpose.xlu0.b32.cont [13/16] %v910, 128
      %997 = vxpose.xlu0.b32.cont [14/16] %v913, 128
      %998 = vxpose.xlu0.b32.cont [15/16] %v918, 128
      %999 = vxpose.xlu0.b32.end [16/16] %v921, 128
      %v1000 = vpop.trf.xlu0
      %v1001 = vpop.trf.xlu0
      %v1002 = vpop.trf.xlu0
      %v1003 = vpop.trf.xlu0
      %v1004 = vpop.trf.xlu0
      %v1005 = vpop.trf.xlu0
      %v1006 = vpop.trf.xlu0
      %v1007 = vpop.trf.xlu0
      %v1008 = vpop.trf.xlu0
      %v1009 = vpop.trf.xlu0
      %v1010 = vpop.trf.xlu0
      %v1011 = vpop.trf.xlu0
      %v1012 = vpop.trf.xlu0
      %v1013 = vpop.trf.xlu0
      %v1014 = vpop.trf.xlu0
      %v1015 = vpop.trf.xlu0
      %v1016 = vpack.c.bf16 %v1000, %v1000
      %1017 = vst [vmem:[%s240] sm:$0xf] %v1016
      %p1018 = scmp.lt.s32.totalorder %s20, 1
      %s1019 = scalar_select %p1018, %s20, 1
      %p1020 = scmp.lt.s32.totalorder %s21, 1
      %s1021 = scalar_select %p1020, %s21, 1
      %s1022 = smul.addr %s1019, 2
      %s1023 = sadd.s32 %s1021, %s1022
      %s1024 = smul.addr %s1023, 4
      %s1025 = scalar_lea.vmem %s2, %s1024
      %s1026 = smul.u32 %s20, 2
      %s1027 = sadd.s32 %s1026, %s21
      %p1028 = scmp.lt.s32.totalorder %s1027, 3
      %s1029 = scalar_select %p1028, %s1027, 3
      %s1030 = scalar_lea.vmem %s3, %s1029
      %s1031 = smul.u32 %s20, 2
      %s1032 = sadd.s32 %s1031, %s21
      %p1033 = scmp.lt.s32.totalorder %s1032, 3
      %s1034 = scalar_select %p1033, %s1032, 3
      %s1035 = scalar_lea.vmem %s4, %s1034
      // Predicated region
      $region29: #{conv_block_forward.2} parent=27 // pred_check
        %p1036 = pneg %p95
      $region30: #{conv_block_forward.2} parent=27 // pred_check_branch
        %1038 = sbr.rel (%p1036) target = $region32
      $region31: #{conv_block_forward.2} parent=27 // pred_region
        _
      $region32: #{conv_block_forward.2} parent=27 // pred_fallthru
        _
      // Predicated region
      $region33: #{conv_block_forward.2} parent=27 // pred_check
        %p1039 = pneg %p125
      $region34: #{conv_block_forward.2} parent=27 // pred_check_branch
        %1041 = sbr.rel (%p1039) target = $region36
      $region35: #{conv_block_forward.2} parent=27 // pred_region
        %s1042 = smul.u32 %s20, 2
        %s1043 = sadd.s32 %s1042, %s21
      $region36: #{conv_block_forward.2} parent=27 // pred_fallthru
        _
      // Predicated region
      $region37: #{conv_block_forward.2} parent=27 // pred_check
        %p1044 = pneg %p155
      $region38: #{conv_block_forward.2} parent=27 // pred_check_branch
        %1046 = sbr.rel (%p1044) target = $region40
      $region39: #{conv_block_forward.2} parent=27 // pred_region
        %s1047 = smul.u32 %s20, 2
        %s1048 = sadd.s32 %s1047, %s21
      $region40: #{conv_block_forward.2} parent=27 // pred_fallthru
        _
    $region28: #{conv_block_forward.2} parent=5 // pred_fallthru
      _
    %p1049 = scmp.le.s32.totalorder 2, %s11
    // Predicated region
    $region41: #{conv_block_forward.2} parent=5 // pred_check
      %p1050 = pneg %p1049
    $region42: #{conv_block_forward.2} parent=5 // pred_check_branch
      %1052 = sbr.rel (%p1050) target = $region44
    $region43: #{conv_block_forward.2} parent=5 // pred_region
      %s1053 = ssub.s32 %s11, 2
      // Predicated region
      $region45: #{conv_block_forward.2} parent=43 // pred_check
        %p1054 = pneg %p101
      $region46: #{conv_block_forward.2} parent=43 // pred_check_branch
        %1056 = sbr.rel (%p1054) target = $region48
      $region47: #{conv_block_forward.2} parent=43 // pred_region
        %p1057 = scmp.lt.s32.totalorder %s22, 1
        %s1058 = scalar_select %p1057, %s22, 1
        %p1059 = scmp.lt.s32.totalorder %s23, 1
        %s1060 = scalar_select %p1059, %s23, 1
        %s1061 = smul.addr %s1058, 2
        %s1062 = sadd.s32 %s1060, %s1061
        %s1063 = smul.addr %s1062, 4
        %s1064 = scalar_lea.vmem %s2, %s1063
      $region48: #{conv_block_forward.2} parent=43 // pred_fallthru
        _
      // Predicated region
      $region49: #{conv_block_forward.2} parent=43 // pred_check
        %p1065 = pneg %p131
      $region50: #{conv_block_forward.2} parent=43 // pred_check_branch
        %1067 = sbr.rel (%p1065) target = $region52
      $region51: #{conv_block_forward.2} parent=43 // pred_region
        %s1068 = smul.u32 %s22, 2
        %s1069 = sadd.s32 %s1068, %s23
        %p1070 = scmp.lt.s32.totalorder %s1069, 3
        %s1071 = scalar_select %p1070, %s1069, 3
        %s1072 = scalar_lea.vmem %s3, %s1071
      $region52: #{conv_block_forward.2} parent=43 // pred_fallthru
        _
      // Predicated region
      $region53: #{conv_block_forward.2} parent=43 // pred_check
        %p1073 = pneg %p161
      $region54: #{conv_block_forward.2} parent=43 // pred_check_branch
        %1075 = sbr.rel (%p1073) target = $region56
      $region55: #{conv_block_forward.2} parent=43 // pred_region
        %s1076 = smul.u32 %s22, 2
        %s1077 = sadd.s32 %s1076, %s23
        %p1078 = scmp.lt.s32.totalorder %s1077, 3
        %s1079 = scalar_select %p1078, %s1077, 3
        %s1080 = scalar_lea.vmem %s4, %s1079
      $region56: #{conv_block_forward.2} parent=43 // pred_fallthru
        _
    $region44: #{conv_block_forward.2} parent=5 // pred_fallthru
      _
  $region6: #{conv_block_forward.2} parent=0 // loop_footer
    %s15 = sadd.s32 1, %s11
  $region7: #{conv_block_forward.2} parent=0 // loop_footer_branch
    %10 = sbr.rel target = $region3
  $region8: #{conv_block_forward.2} parent=0 // loop_exit
    _

</llo_original>
